<compile_context>
chip_gen: v6e
topology: v6e:2x2x1
jax: 0.10.0
libtpu: 0.0.40
codegen_flags: <defaults>
</compile_context>

<pallas_src>
import jax
import jax.numpy as jnp
from jax.experimental import pallas as pl
from jax.experimental.pallas import tpu as pltpu


def _round_up(x, m):
    return (x + m - 1) // m * m


def _pick_batch_tile(B, Lq, Ld, E, budget_bytes=32 * 1024 * 1024):
    """Pick batch tile TB (multiple of 8) so the double-buffered working set fits."""
    TB = min(128, _round_up(B, 8))

    def step_bytes(tb):
        q = tb * Lq * E * 4
        d = 2 * tb * Ld * E * 4           # stacked docs block
        small = 2 * tb * 4 * 2            # lens + scores
        out = tb * 128 * 4
        return q + d + small + out

    # 2x for double-buffering + one doc-sized elementwise temp inside the kernel.
    while TB > 8 and 2 * step_bytes(TB) + 2 * TB * Ld * E * 4 > budget_bytes:
        TB = max(8, _round_up(TB // 2, 8))
    return TB


def _pairwise_kernel(q_emb_ref, d_emb_ref, lens_ref, score_ref,
                     w1_ref, w1s_ref, b1_ref, w2t_ref, b2_ref, out_ref):
    TB, _, E = q_emb_ref.shape
    Ld = d_emb_ref.shape[2]

    # ---- pooled query embedding (mean over query tokens) ----
    q_pool = jnp.mean(q_emb_ref[...].astype(jnp.float32), axis=1)        # (TB, E)

    # ---- both documents stacked along batch: (2*TB, Ld, E) ----
    d_emb = d_emb_ref[...].astype(jnp.float32).reshape(2 * TB, Ld, E)
    lens = jnp.concatenate([lens_ref[0], lens_ref[1]], axis=0)           # (2TB, 1) int32
    score = jnp.concatenate([score_ref[0], score_ref[1]], axis=0)        # (2TB, 1) f32

    # length mask built in-kernel (no [B, Ld] mask traffic from HBM)
    pos = jax.lax.broadcasted_iota(jnp.int32, (2 * TB, Ld), 1)
    mask = (pos < lens).astype(jnp.float32)                              # (2TB, Ld)

    d_sum = jnp.sum(d_emb * mask[:, :, None], axis=1)                    # (2TB, E)
    denom = jnp.maximum(jnp.sum(mask, axis=1, keepdims=True), 1.0)       # (2TB, 1)
    d_pool = d_sum / denom                                               # (2TB, E)

    # ---- fused hidden layer: one K=3E MXU matmul instead of three K=E ----
    q2 = jnp.concatenate([q_pool, q_pool], axis=0)                       # (2TB, E)
    feat = jnp.concatenate([q2, d_pool, q2 * d_pool], axis=-1)           # (2TB, 3E)

    h = (jnp.dot(feat, w1_ref[...], preferred_element_type=jnp.float32)
         + score * w1s_ref[...]
         + b1_ref[...])                                                  # (2TB, H)
    h = jnp.maximum(h, 0.0)

    # ---- final N=1 projection as a VPU/XLU reduction (MXU would be 1/256 lanes) ----
    s = jnp.sum(h * w2t_ref[...], axis=-1, keepdims=True) + b2_ref[...]  # (2TB, 1)

    diff = s[:TB] - s[TB:]                                               # (TB, 1)
    # lane-dense store: broadcast the score across the 128-lane output slab
    out_ref[...] = jnp.broadcast_to(diff, out_ref.shape)


def pairwise_scorer(params, query, document_1, document_2, lens_1, lens_2,
                    doc_1_score, doc_2_score, to_idx=None):
    # TODO(synk): `to_idx` (vocab remapping hook) has no effect here; treated as None.
    B, Lq = query.shape
    _, Ld = document_1.shape
    E = params['query_embed'].shape[1]
    H = params['w1_q'].shape[1]

    TB = _pick_batch_tile(B, Lq, Ld, E)
    B_pad = _round_up(B, TB)
    pad = B_pad - B

    def pad_b(x):
        if pad == 0:
            return x
        return jnp.pad(x, ((0, pad),) + ((0, 0),) * (x.ndim - 1))

    query_p = pad_b(query)
    doc1_p = pad_b(document_1)
    doc2_p = pad_b(document_2)
    lens = jnp.stack([pad_b(lens_1.astype(jnp.int32)),
                      pad_b(lens_2.astype(jnp.int32))], axis=0)[..., None]       # (2, B_pad, 1)
    scores = jnp.stack([pad_b(doc_1_score.astype(jnp.float32)),
                        pad_b(doc_2_score.astype(jnp.float32))], axis=0)[..., None]

    # --- glue: embedding gathers (plain JAX) ---
    # TODO(synk): gather could be fused into the kernel (scalar-prefetch token ids +
    # per-row DMA from the embedding tables) to remove an HBM round trip.
    q_emb = params['query_embed'][query_p]                       # (B_pad, Lq, E)
    d_emb = jnp.stack([params['doc_embed'][doc1_p],
                       params['doc_embed'][doc2_p]], axis=0)     # (2, B_pad, Ld, E)

    # fused hidden-layer weight and transposed output projection
    w1 = jnp.concatenate([params['w1_q'], params['w1_d'], params['w1_x']],
                         axis=0)                                 # (3E, H)
    w2t = params['w2'].T                                         # (1, H)

    def weight_spec(shape):
        return pl.BlockSpec(shape, lambda i, _s=shape: (0,) * len(_s))

    grid = (B_pad // TB,)
    out = pl.pallas_call(
        _pairwise_kernel,
        out_shape=jax.ShapeDtypeStruct((B_pad, 128), jnp.float32),
        grid=grid,
        in_specs=[
            pl.BlockSpec((TB, Lq, E), lambda i: (i, 0, 0)),        # q_emb
            pl.BlockSpec((2, TB, Ld, E), lambda i: (0, i, 0, 0)),  # stacked doc_emb
            pl.BlockSpec((2, TB, 1), lambda i: (0, i, 0)),         # lens
            pl.BlockSpec((2, TB, 1), lambda i: (0, i, 0)),         # doc scores
            weight_spec((3 * E, H)),                               # fused W1
            weight_spec((1, H)),                                   # w1_s
            weight_spec((1, H)),                                   # b1
            weight_spec((1, H)),                                   # w2^T
            weight_spec((1, 1)),                                   # b2
        ],
        out_specs=pl.BlockSpec((TB, 128), lambda i: (i, 0)),
        compiler_params=pltpu.CompilerParams(
            dimension_semantics=("parallel",),
            vmem_limit_bytes=48 * 1024 * 1024,
        ),
    )(q_emb, d_emb, lens, scores, w1, params['w1_s'], params['b1'],
      w2t, params['b2'])
    return out[:B, 0]                                            # [B]


def _reference(params, query, doc1, doc2, lens_1, lens_2, s1, s2):
    """Pure-JAX reference for correctness check."""
    def pointwise(doc, lens, score):
        q_pool = jnp.mean(params['query_embed'][query], axis=1)
        d_emb = params['doc_embed'][doc]
        mask = (jnp.arange(doc.shape[1])[None, :] < lens[:, None]).astype(jnp.float32)
        d_pool = jnp.sum(d_emb * mask[:, :, None], axis=1) / jnp.maximum(
            jnp.sum(mask, axis=1, keepdims=True), 1.0)
        h = (q_pool @ params['w1_q'] + d_pool @ params['w1_d']
             + (q_pool * d_pool) @ params['w1_x']
             + score.reshape(-1, 1) * params['w1_s'] + params['b1'])
        h = jnp.maximum(h, 0.0)
        return (h @ params['w2'] + params['b2'])[:, 0]
    return pointwise(doc1, lens_1, s1) - pointwise(doc2, lens_2, s2)


if __name__ == "__main__":
    B, Lq, Ld, E, H = 2, 8, 16, 32, 32
    Vq, Vd = 64, 128

    key = jax.random.PRNGKey(0)
    keys = jax.random.split(key, 12)
    params = {
        'query_embed': 0.1 * jax.random.normal(keys[0], (Vq, E), jnp.float32),
        'doc_embed':   0.1 * jax.random.normal(keys[1], (Vd, E), jnp.float32),
        'w1_q': 0.1 * jax.random.normal(keys[2], (E, H), jnp.float32),
        'w1_d': 0.1 * jax.random.normal(keys[3], (E, H), jnp.float32),
        'w1_x': 0.1 * jax.random.normal(keys[4], (E, H), jnp.float32),
        'w1_s': 0.1 * jax.random.normal(keys[5], (1, H), jnp.float32),
        'b1':   jnp.zeros((1, H), jnp.float32),
        'w2':   0.1 * jax.random.normal(keys[6], (H, 1), jnp.float32),
        'b2':   jnp.zeros((1, 1), jnp.float32),
    }

    query = jax.random.randint(keys[7], (B, Lq), 0, Vq)
    document_1 = jax.random.randint(keys[8], (B, Ld), 0, Vd)
    document_2 = jax.random.randint(keys[9], (B, Ld), 0, Vd)
    lens_1 = jnp.array([10, 16], dtype=jnp.int32)
    lens_2 = jnp.array([16, 7], dtype=jnp.int32)
    doc_1_score = jax.random.normal(keys[10], (B,), jnp.float32)
    doc_2_score = jax.random.normal(keys[11], (B,), jnp.float32)

    out = pairwise_scorer(params, query, document_1, document_2,
                          lens_1, lens_2, doc_1_score, doc_2_score)
    jax.block_until_ready(out)

    ref = _reference(params, query, document_1, document_2,
                     lens_1, lens_2, doc_1_score, doc_2_score)
    assert out.shape == (B,)
    assert jnp.allclose(out, ref, atol=1e-2, rtol=1e-2)

    print("KERNEL_OK")
</pallas_src>

<mosaic_0001>
module attributes {stable_mosaic.version = 11 : i64} {
  func.func @_pairwise_kernel(%arg0: i32, %arg1: memref<8x8x32xf32, #tpu.memory_space<vmem>>, %arg2: memref<2x8x16x32xf32, #tpu.memory_space<vmem>>, %arg3: memref<2x8x1xi32, #tpu.memory_space<vmem>>, %arg4: memref<2x8x1xf32, #tpu.memory_space<vmem>>, %arg5: memref<96x32xf32, #tpu.memory_space<vmem>>, %arg6: memref<1x32xf32, #tpu.memory_space<vmem>>, %arg7: memref<1x32xf32, #tpu.memory_space<vmem>>, %arg8: memref<1x32xf32, #tpu.memory_space<vmem>>, %arg9: memref<1x1xf32, #tpu.memory_space<vmem>>, %arg10: memref<8x128xf32, #tpu.memory_space<vmem>>) attributes {dimension_semantics = [#tpu.dimension_semantics<parallel>], iteration_bounds = array<i64: 1>, scalar_prefetch = 0 : i64, scratch_operands = 0 : i64, tpu.core_type = #tpu.core_type<tc>, window_params = [{transform_indices = @transform_0, window_bounds = array<i64: 8, 8, 32>}, {transform_indices = @transform_1, window_bounds = array<i64: 2, 8, 16, 32>}, {transform_indices = @transform_2, window_bounds = array<i64: 2, 8, 1>}, {transform_indices = @transform_3, window_bounds = array<i64: 2, 8, 1>}, {pipeline_mode = #tpu.pipeline_mode<synchronous>, transform_indices = @transform_4, window_bounds = array<i64: 96, 32>}, {pipeline_mode = #tpu.pipeline_mode<synchronous>, transform_indices = @transform_5, window_bounds = array<i64: 1, 32>}, {pipeline_mode = #tpu.pipeline_mode<synchronous>, transform_indices = @transform_6, window_bounds = array<i64: 1, 32>}, {pipeline_mode = #tpu.pipeline_mode<synchronous>, transform_indices = @transform_7, window_bounds = array<i64: 1, 32>}, {pipeline_mode = #tpu.pipeline_mode<synchronous>, transform_indices = @transform_8, window_bounds = array<i64: 1, 1>}, {transform_indices = @transform_9, window_bounds = array<i64: 8, 128>}]} {
    %c0 = arith.constant 0 : index
    %c0_0 = arith.constant 0 : index
    %c0_1 = arith.constant 0 : index
    %0 = vector.load %arg1[%c0, %c0_0, %c0_1] : memref<8x8x32xf32, #tpu.memory_space<vmem>>, vector<8x8x32xf32>
    %cst = arith.constant dense<0.000000e+00> : vector<8x32xf32>
    %1 = vector.multi_reduction <add>, %0, %cst [1] : vector<8x8x32xf32> to vector<8x32xf32>
    %cst_2 = arith.constant 8.000000e+00 : f32
    %2 = vector.broadcast %cst_2 : f32 to vector<8x32xf32>
    %3 = arith.divf %1, %2 : vector<8x32xf32>
    %c0_3 = arith.constant 0 : index
    %c0_4 = arith.constant 0 : index
    %c0_5 = arith.constant 0 : index
    %c0_6 = arith.constant 0 : index
    %4 = vector.load %arg2[%c0_3, %c0_4, %c0_5, %c0_6] : memref<2x8x16x32xf32, #tpu.memory_space<vmem>>, vector<2x8x16x32xf32>
    %5 = vector.shape_cast %4 : vector<2x8x16x32xf32> to vector<16x16x32xf32>
    %c0_7 = arith.constant 0 : index
    %c0_8 = arith.constant 0 : index
    %c0_9 = arith.constant 0 : index
    %6 = vector.load %arg3[%c0_7, %c0_8, %c0_9] : memref<2x8x1xi32, #tpu.memory_space<vmem>>, vector<1x8x1xi32>
    %7 = vector.shape_cast %6 : vector<1x8x1xi32> to vector<8x1xi32>
    %c1 = arith.constant 1 : index
    %c0_10 = arith.constant 0 : index
    %c0_11 = arith.constant 0 : index
    %8 = vector.load %arg3[%c1, %c0_10, %c0_11] : memref<2x8x1xi32, #tpu.memory_space<vmem>>, vector<1x8x1xi32>
    %9 = vector.shape_cast %8 : vector<1x8x1xi32> to vector<8x1xi32>
    %10 = tpu.concatenate %7, %9 in 0 : vector<8x1xi32>, vector<8x1xi32> -> vector<16x1xi32>
    %c0_12 = arith.constant 0 : index
    %c0_13 = arith.constant 0 : index
    %c0_14 = arith.constant 0 : index
    %11 = vector.load %arg4[%c0_12, %c0_13, %c0_14] : memref<2x8x1xf32, #tpu.memory_space<vmem>>, vector<1x8x1xf32>
    %12 = vector.shape_cast %11 : vector<1x8x1xf32> to vector<8x1xf32>
    %c1_15 = arith.constant 1 : index
    %c0_16 = arith.constant 0 : index
    %c0_17 = arith.constant 0 : index
    %13 = vector.load %arg4[%c1_15, %c0_16, %c0_17] : memref<2x8x1xf32, #tpu.memory_space<vmem>>, vector<1x8x1xf32>
    %14 = vector.shape_cast %13 : vector<1x8x1xf32> to vector<8x1xf32>
    %15 = tpu.concatenate %12, %14 in 0 : vector<8x1xf32>, vector<8x1xf32> -> vector<16x1xf32>
    %16 = tpu.iota {dimensions = array<i32: 1>} : vector<16x16xi32>
    %17 = vector.broadcast %10 : vector<16x1xi32> to vector<16x16xi32>
    %18 = arith.cmpi slt, %16, %17 : vector<16x16xi32>
    %19 = arith.extui %18 : vector<16x16xi1> to vector<16x16xi32>
    %20 = arith.sitofp %19 : vector<16x16xi32> to vector<16x16xf32>
    %21 = vector.shape_cast %20 : vector<16x16xf32> to vector<16x16x1xf32>
    %22 = vector.broadcast %21 : vector<16x16x1xf32> to vector<16x16x32xf32>
    %23 = arith.mulf %5, %22 : vector<16x16x32xf32>
    %cst_18 = arith.constant dense<0.000000e+00> : vector<16x32xf32>
    %24 = vector.multi_reduction <add>, %23, %cst_18 [1] : vector<16x16x32xf32> to vector<16x32xf32>
    %cst_19 = arith.constant dense<0.000000e+00> : vector<16xf32>
    %25 = vector.multi_reduction <add>, %20, %cst_19 [1] : vector<16x16xf32> to vector<16xf32>
    %26 = vector.shape_cast %25 : vector<16xf32> to vector<16x1xf32>
    %cst_20 = arith.constant 1.000000e+00 : f32
    %27 = vector.broadcast %cst_20 : f32 to vector<16x1xf32>
    %28 = arith.maximumf %26, %27 : vector<16x1xf32>
    %29 = vector.broadcast %28 : vector<16x1xf32> to vector<16x32xf32>
    %30 = arith.divf %24, %29 : vector<16x32xf32>
    %31 = tpu.concatenate %3, %3 in 0 : vector<8x32xf32>, vector<8x32xf32> -> vector<16x32xf32>
    %32 = arith.mulf %31, %30 : vector<16x32xf32>
    %33 = tpu.concatenate %31, %30, %32 in 1 : vector<16x32xf32>, vector<16x32xf32>, vector<16x32xf32> -> vector<16x96xf32>
    %c0_21 = arith.constant 0 : index
    %c0_22 = arith.constant 0 : index
    %34 = vector.load %arg5[%c0_21, %c0_22] : memref<96x32xf32, #tpu.memory_space<vmem>>, vector<96x32xf32>
    %cst_23 = arith.constant dense<0.000000e+00> : vector<16x32xf32>
    %35 = tpu.matmul %33, %34, %cst_23 {dimension_numbers = #tpu.dot_dimension_numbers<[1], [0], [0], [1], [0, 0, 1, 1], [], []>} : vector<16x96xf32>, vector<96x32xf32>, vector<16x32xf32> -> vector<16x32xf32>
    %c0_24 = arith.constant 0 : index
    %c0_25 = arith.constant 0 : index
    %36 = vector.load %arg6[%c0_24, %c0_25] : memref<1x32xf32, #tpu.memory_space<vmem>>, vector<1x32xf32>
    %37 = vector.broadcast %15 : vector<16x1xf32> to vector<16x32xf32>
    %38 = vector.broadcast %36 : vector<1x32xf32> to vector<16x32xf32>
    %39 = arith.mulf %37, %38 : vector<16x32xf32>
    %40 = arith.addf %35, %39 : vector<16x32xf32>
    %c0_26 = arith.constant 0 : index
    %c0_27 = arith.constant 0 : index
    %41 = vector.load %arg7[%c0_26, %c0_27] : memref<1x32xf32, #tpu.memory_space<vmem>>, vector<1x32xf32>
    %42 = vector.broadcast %41 : vector<1x32xf32> to vector<16x32xf32>
    %43 = arith.addf %40, %42 : vector<16x32xf32>
    %cst_28 = arith.constant 0.000000e+00 : f32
    %44 = vector.broadcast %cst_28 : f32 to vector<16x32xf32>
    %45 = arith.maximumf %43, %44 : vector<16x32xf32>
    %c0_29 = arith.constant 0 : index
    %c0_30 = arith.constant 0 : index
    %46 = vector.load %arg8[%c0_29, %c0_30] : memref<1x32xf32, #tpu.memory_space<vmem>>, vector<1x32xf32>
    %47 = vector.broadcast %46 : vector<1x32xf32> to vector<16x32xf32>
    %48 = arith.mulf %45, %47 : vector<16x32xf32>
    %cst_31 = arith.constant dense<0.000000e+00> : vector<16xf32>
    %49 = vector.multi_reduction <add>, %48, %cst_31 [1] : vector<16x32xf32> to vector<16xf32>
    %50 = vector.shape_cast %49 : vector<16xf32> to vector<16x1xf32>
    %c0_32 = arith.constant 0 : index
    %c0_33 = arith.constant 0 : index
    %51 = vector.load %arg9[%c0_32, %c0_33] : memref<1x1xf32, #tpu.memory_space<vmem>>, vector<1x1xf32>
    %52 = vector.broadcast %51 : vector<1x1xf32> to vector<16x1xf32>
    %53 = arith.addf %50, %52 : vector<16x1xf32>
    %54 = vector.extract_strided_slice %53 {offsets = [0, 0], sizes = [8, 1], strides = [1, 1]} : vector<16x1xf32> to vector<8x1xf32>
    %55 = vector.extract_strided_slice %53 {offsets = [8, 0], sizes = [8, 1], strides = [1, 1]} : vector<16x1xf32> to vector<8x1xf32>
    %56 = arith.subf %54, %55 : vector<8x1xf32>
    %57 = vector.shape_cast %56 : vector<8x1xf32> to vector<8x1xf32>
    %58 = vector.broadcast %57 : vector<8x1xf32> to vector<8x128xf32>
    %c0_34 = arith.constant 0 : index
    %c0_35 = arith.constant 0 : index
    %59 = vector.load %arg10[%c0_34, %c0_35] : memref<8x128xf32, #tpu.memory_space<vmem>>, vector<8x128xf32>
    tpu.vector_store %arg10[%c0_34, %c0_35], %58 {strides = array<i32>} : memref<8x128xf32, #tpu.memory_space<vmem>>, vector<8x128xf32>,
    return
  }
  func.func @transform_0(%arg0: i32) -> (i32, i32, i32) {
    %c0_i32 = arith.constant 0 : i32
    %c0_i32_0 = arith.constant 0 : i32
    %c0_i32_1 = arith.constant 0 : i32
    return %arg0, %c0_i32, %c0_i32_0 : i32, i32, i32
  }
  func.func @transform_1(%arg0: i32) -> (i32, i32, i32, i32) {
    %c0_i32 = arith.constant 0 : i32
    %c0_i32_0 = arith.constant 0 : i32
    %c0_i32_1 = arith.constant 0 : i32
    %c0_i32_2 = arith.constant 0 : i32
    return %c0_i32, %arg0, %c0_i32_0, %c0_i32_1 : i32, i32, i32, i32
  }
  func.func @transform_2(%arg0: i32) -> (i32, i32, i32) {
    %c0_i32 = arith.constant 0 : i32
    %c0_i32_0 = arith.constant 0 : i32
    %c0_i32_1 = arith.constant 0 : i32
    return %c0_i32, %arg0, %c0_i32_0 : i32, i32, i32
  }
  func.func @transform_3(%arg0: i32) -> (i32, i32, i32) {
    %c0_i32 = arith.constant 0 : i32
    %c0_i32_0 = arith.constant 0 : i32
    %c0_i32_1 = arith.constant 0 : i32
    return %c0_i32, %arg0, %c0_i32_0 : i32, i32, i32
  }
  func.func @transform_4(%arg0: i32) -> (i32, i32) {
    %c0_i32 = arith.constant 0 : i32
    %c0_i32_0 = arith.constant 0 : i32
    %c0_i32_1 = arith.constant 0 : i32
    return %c0_i32, %c0_i32_0 : i32, i32
  }
  func.func @transform_5(%arg0: i32) -> (i32, i32) {
    %c0_i32 = arith.constant 0 : i32
    %c0_i32_0 = arith.constant 0 : i32
    %c0_i32_1 = arith.constant 0 : i32
    return %c0_i32, %c0_i32_0 : i32, i32
  }
  func.func @transform_6(%arg0: i32) -> (i32, i32) {
    %c0_i32 = arith.constant 0 : i32
    %c0_i32_0 = arith.constant 0 : i32
    %c0_i32_1 = arith.constant 0 : i32
    return %c0_i32, %c0_i32_0 : i32, i32
  }
  func.func @transform_7(%arg0: i32) -> (i32, i32) {
    %c0_i32 = arith.constant 0 : i32
    %c0_i32_0 = arith.constant 0 : i32
    %c0_i32_1 = arith.constant 0 : i32
    return %c0_i32, %c0_i32_0 : i32, i32
  }
  func.func @transform_8(%arg0: i32) -> (i32, i32) {
    %c0_i32 = arith.constant 0 : i32
    %c0_i32_0 = arith.constant 0 : i32
    %c0_i32_1 = arith.constant 0 : i32
    return %c0_i32, %c0_i32_0 : i32, i32
  }
  func.func @transform_9(%arg0: i32) -> (i32, i32) {
    %c0_i32 = arith.constant 0 : i32
    %c0_i32_0 = arith.constant 0 : i32
    return %arg0, %c0_i32 : i32, i32
  }
}

</mosaic_0001>

<llo_original>
// kernel: tpu_custom_call.1
$region0: #{tpu_custom_call.1}
  #allocation0 [shape = 'u32[]', space=smem, size = 0x4, offset = 0x4, fixed_abs, tag = 'smem constant byte address 0x4 - core index']
  #allocation1 [shape = 'u32[144,128]{1,0:T(1,128)}', space=vmem, size = 0x12000, scoped, tag = 'internal scratch']
  #allocation2 [shape = 'f32[1,1]{1,0:T(1,128)S(1)}', space=vmem, size = 0x200, scoped, tag = 'scoped memory for tpu_custom_call.1']
  %s0 = inlined_call_operand.vmem [shape: f32[8,8,32], index: 0, kind: input, shape index: {}]
  %s1 = inlined_call_operand.hbm [shape: f32[2,8,16,32], index: 1, kind: input, shape index: {}]
  %s2 = inlined_call_operand.vmem [shape: s32[2,8,1], index: 2, kind: input, shape index: {}]
  %s3 = inlined_call_operand.vmem [shape: f32[2,8,1], index: 3, kind: input, shape index: {}]
  %s4 = inlined_call_operand.vmem [shape: f32[96,32], index: 4, kind: input, shape index: {}]
  %s5 = inlined_call_operand.vmem [shape: f32[1,32], index: 5, kind: input, shape index: {}]
  %s6 = inlined_call_operand.vmem [shape: f32[1,32], index: 6, kind: input, shape index: {}]
  %s7 = inlined_call_operand.vmem [shape: f32[1,32], index: 7, kind: input, shape index: {}]
  %s8 = inlined_call_operand.<no memory space> [shape: f32[1,1], index: 8, kind: input, shape index: {}]
  %s9 = inlined_call_operand.hbm [shape: f32[8,128], index: 9, kind: output, shape index: {}]
  %s10 = sld [smem:[#allocation0]]
  $region50: #{tpu_custom_call.1} parent=0
    _
  %s12 = ssub.s32 1, %s10
  %s13 = scalar_select 0, %s12, %s10
  %v14 = vstv %s8
  %15 = vst [vmem:[#allocation2] sm:$0x1] %v14
  $region1: #{tpu_custom_call.1} parent=0
    #allocation3 [shape = 'u8[131072]{0}', space=vmem, size = 0x20000, scoped, tag = 'input window, operand 1, single buffered']
    #allocation4 [shape = 's32[1]{0}', space=sflag, size = 0x4, scoped, tag = 'scoped memory for tpu_custom_call.1']
    #allocation5 [shape = 's32[1]{0}', space=sflag, size = 0x4, scoped, tag = 'scoped memory for tpu_custom_call.1']
    #allocation6 [shape = 'u8[4096]{0}', space=vmem, size = 0x1000, scoped, tag = 'output window, operand 0, single buffered']
    %16 = vsyncpa [#allocation4], 0
    %17 = vsyncpa [#allocation5], 0
    // Predicated region
    $region2: #{tpu_custom_call.1} parent=1 // pred_check
      _
    $region3: #{tpu_custom_call.1} parent=1 // pred_check_branch
      %19 = sbr.rel (0) target = $region5
    $region4: #{tpu_custom_call.1} parent=1 // pred_region
      _
    $region5: #{tpu_custom_call.1} parent=1 // pred_fallthru
      _
    // Predicated region
    $region6: #{tpu_custom_call.1} parent=1 // pred_check
      _
    $region7: #{tpu_custom_call.1} parent=1 // pred_check_branch
      %21 = sbr.rel (0) target = $region9
    $region8: #{tpu_custom_call.1} parent=1 // pred_region
      %s23 = ssub.s32 4096, 4096
      %24 = vsyncadd [#allocation4], %s23
      %s25 = sshll.u32 [#allocation3], 4
      %s26 = int_to_ptr.vmem [resolvable:$true] %s25
      %31 = dma.hbm_to_vmem [thread:$0]  %s1, 4096, %s26, [#allocation4], 128, 128, 8
    $region9: #{tpu_custom_call.1} parent=1 // pred_fallthru
      _
    // Predicated region
    $region10: #{tpu_custom_call.1} parent=1 // pred_check
      _
    $region11: #{tpu_custom_call.1} parent=1 // pred_check_branch
      %33 = sbr.rel (0) target = $region13
    $region12: #{tpu_custom_call.1} parent=1 // pred_region
      _
    $region13: #{tpu_custom_call.1} parent=1 // pred_fallthru
      _
    // Predicated region
    $region14: #{tpu_custom_call.1} parent=1 // pred_check
      _
    $region15: #{tpu_custom_call.1} parent=1 // pred_check_branch
      %35 = sbr.rel (0) target = $region17
    $region16: #{tpu_custom_call.1} parent=1 // pred_region
      _
    $region17: #{tpu_custom_call.1} parent=1 // pred_fallthru
      _
    // Predicated region
    $region18: #{tpu_custom_call.1} parent=1 // pred_check
      _
    $region19: #{tpu_custom_call.1} parent=1 // pred_check_branch
      %37 = sbr.rel (0) target = $region21
    $region20: #{tpu_custom_call.1} parent=1 // pred_region
      _
    $region21: #{tpu_custom_call.1} parent=1 // pred_fallthru
      _
    // Predicated region
    $region22: #{tpu_custom_call.1} parent=1 // pred_check
      _
    $region23: #{tpu_custom_call.1} parent=1 // pred_check_branch
      %39 = sbr.rel (0) target = $region25
    $region24: #{tpu_custom_call.1} parent=1 // pred_region
      _
    $region25: #{tpu_custom_call.1} parent=1 // pred_fallthru
      _
    // Predicated region
    $region26: #{tpu_custom_call.1} parent=1 // pred_check
      _
    $region27: #{tpu_custom_call.1} parent=1 // pred_check_branch
      %41 = sbr.rel (0) target = $region29
    $region28: #{tpu_custom_call.1} parent=1 // pred_region
      _
    $region29: #{tpu_custom_call.1} parent=1 // pred_fallthru
      _
    // Predicated region
    $region30: #{tpu_custom_call.1} parent=1 // pred_check
      _
    $region31: #{tpu_custom_call.1} parent=1 // pred_check_branch
      %43 = sbr.rel (0) target = $region33
    $region32: #{tpu_custom_call.1} parent=1 // pred_region
      _
    $region33: #{tpu_custom_call.1} parent=1 // pred_fallthru
      _
    // Predicated region
    $region34: #{tpu_custom_call.1} parent=1 // pred_check
      _
    $region35: #{tpu_custom_call.1} parent=1 // pred_check_branch
      %45 = sbr.rel (0) target = $region37
    $region36: #{tpu_custom_call.1} parent=1 // pred_region
      _
    $region37: #{tpu_custom_call.1} parent=1 // pred_fallthru
      _
    // Predicated region
    $region38: #{tpu_custom_call.1} parent=1 // pred_check
      _
    $region39: #{tpu_custom_call.1} parent=1 // pred_check_branch
      %47 = sbr.rel (0) target = $region41
    $region40: #{tpu_custom_call.1} parent=1 // pred_region
      %48 = dma.done [#allocation4], 4096
    $region41: #{tpu_custom_call.1} parent=1 // pred_fallthru
      _
    %v49 = vld [vmem:[%s0] sm:$0xff]
    %v50 = vld [vmem:[%s0 + $0x8] sm:$0xff]
    %v51 = vld [vmem:[%s0 + $0x10] sm:$0xff]
    %v52 = vld [vmem:[%s0 + $0x18] sm:$0xff]
    %v53 = vld [vmem:[%s0 + $0x20] sm:$0xff]
    %v54 = vld [vmem:[%s0 + $0x28] sm:$0xff]
    %v55 = vld [vmem:[%s0 + $0x30] sm:$0xff]
    %v56 = vld [vmem:[%s0 + $0x38] sm:$0xff]
    %vm57 = vcmask 261120
    %v58 = vsel %vm57, %v49, 0.0
    %v59 = vrot.slane %v58, 4
    %v60 = vadd.f32 %v58, %v59
    %v61 = vrot.slane %v60, 2
    %v62 = vadd.f32 %v60, %v61
    %v63 = vrot.slane %v62, 1
    %v64 = vadd.f32 %v62, %v63
    %v65 = vsel %vm57, %v50, 0.0
    %v66 = vrot.slane %v65, 4
    %v67 = vadd.f32 %v65, %v66
    %v68 = vrot.slane %v67, 2
    %v69 = vadd.f32 %v67, %v68
    %v70 = vrot.slane %v69, 1
    %v71 = vadd.f32 %v69, %v70
    %v72 = vsel %vm57, %v51, 0.0
    %v73 = vrot.slane %v72, 4
    %v74 = vadd.f32 %v72, %v73
    %v75 = vrot.slane %v74, 2
    %v76 = vadd.f32 %v74, %v75
    %v77 = vrot.slane %v76, 1
    %v78 = vadd.f32 %v76, %v77
    %v79 = vsel %vm57, %v52, 0.0
    %v80 = vrot.slane %v79, 4
    %v81 = vadd.f32 %v79, %v80
    %v82 = vrot.slane %v81, 2
    %v83 = vadd.f32 %v81, %v82
    %v84 = vrot.slane %v83, 1
    %v85 = vadd.f32 %v83, %v84
    %v86 = vsel %vm57, %v53, 0.0
    %v87 = vrot.slane %v86, 4
    %v88 = vadd.f32 %v86, %v87
    %v89 = vrot.slane %v88, 2
    %v90 = vadd.f32 %v88, %v89
    %v91 = vrot.slane %v90, 1
    %v92 = vadd.f32 %v90, %v91
    %v93 = vsel %vm57, %v54, 0.0
    %v94 = vrot.slane %v93, 4
    %v95 = vadd.f32 %v93, %v94
    %v96 = vrot.slane %v95, 2
    %v97 = vadd.f32 %v95, %v96
    %v98 = vrot.slane %v97, 1
    %v99 = vadd.f32 %v97, %v98
    %v100 = vsel %vm57, %v55, 0.0
    %v101 = vrot.slane %v100, 4
    %v102 = vadd.f32 %v100, %v101
    %v103 = vrot.slane %v102, 2
    %v104 = vadd.f32 %v102, %v103
    %v105 = vrot.slane %v104, 1
    %v106 = vadd.f32 %v104, %v105
    %v107 = vsel %vm57, %v56, 0.0
    %v108 = vrot.slane %v107, 4
    %v109 = vadd.f32 %v107, %v108
    %v110 = vrot.slane %v109, 2
    %v111 = vadd.f32 %v109, %v110
    %v112 = vrot.slane %v111, 1
    %v113 = vadd.f32 %v111, %v112
    %v114 = vrcp.pop 8.0
    %v115 = vmul.f32 %v64, %v114
    %v116 = vmul.f32 %v71, %v114
    %v117 = vmul.f32 %v78, %v114
    %v118 = vmul.f32 %v85, %v114
    %v119 = vmul.f32 %v92, %v114
    %v120 = vmul.f32 %v99, %v114
    %v121 = vmul.f32 %v106, %v114
    %v122 = vmul.f32 %v113, %v114
    %v123 = vld [vmem:[#allocation3] sm:$0xff]
    %v124 = vld [vmem:[#allocation3 + $0x8] sm:$0xff]
    %v125 = vld [vmem:[#allocation3 + $0x10] sm:$0xff]
    %v126 = vld [vmem:[#allocation3 + $0x18] sm:$0xff]
    %v127 = vld [vmem:[#allocation3 + $0x20] sm:$0xff]
    %v128 = vld [vmem:[#allocation3 + $0x28] sm:$0xff]
    %v129 = vld [vmem:[#allocation3 + $0x30] sm:$0xff]
    %v130 = vld [vmem:[#allocation3 + $0x38] sm:$0xff]
    %v131 = vld [vmem:[#allocation3 + $0x40] sm:$0xff]
    %v132 = vld [vmem:[#allocation3 + $0x48] sm:$0xff]
    %v133 = vld [vmem:[#allocation3 + $0x50] sm:$0xff]
    %v134 = vld [vmem:[#allocation3 + $0x58] sm:$0xff]
    %v135 = vld [vmem:[#allocation3 + $0x60] sm:$0xff]
    %v136 = vld [vmem:[#allocation3 + $0x68] sm:$0xff]
    %v137 = vld [vmem:[#allocation3 + $0x70] sm:$0xff]
    %v138 = vld [vmem:[#allocation3 + $0x78] sm:$0xff]
    %v139 = vld [vmem:[#allocation3 + $0x80] sm:$0xff]
    %v140 = vld [vmem:[#allocation3 + $0x88] sm:$0xff]
    %v141 = vld [vmem:[#allocation3 + $0x90] sm:$0xff]
    %v142 = vld [vmem:[#allocation3 + $0x98] sm:$0xff]
    %v143 = vld [vmem:[#allocation3 + $0xa0] sm:$0xff]
    %v144 = vld [vmem:[#allocation3 + $0xa8] sm:$0xff]
    %v145 = vld [vmem:[#allocation3 + $0xb0] sm:$0xff]
    %v146 = vld [vmem:[#allocation3 + $0xb8] sm:$0xff]
    %v147 = vld [vmem:[#allocation3 + $0xc0] sm:$0xff]
    %v148 = vld [vmem:[#allocation3 + $0xc8] sm:$0xff]
    %v149 = vld [vmem:[#allocation3 + $0xd0] sm:$0xff]
    %v150 = vld [vmem:[#allocation3 + $0xd8] sm:$0xff]
    %v151 = vld [vmem:[#allocation3 + $0xe0] sm:$0xff]
    %v152 = vld [vmem:[#allocation3 + $0xe8] sm:$0xff]
    %v153 = vld [vmem:[#allocation3 + $0xf0] sm:$0xff]
    %v154 = vld [vmem:[#allocation3 + $0xf8] sm:$0xff]
    %v155 = vld [vmem:[%s2] sm:$0xff]
    %s156 = scalar_lea.vmem %s2, 8
    %v157 = vld [vmem:[%s156] sm:$0xff]
    %v158 = vld [vmem:[%s3] sm:$0xff]
    %s159 = scalar_lea.vmem %s3, 8
    %v160 = vld [vmem:[%s159] sm:$0xff]
    %v161 = vlaneseq
    %v162 = vand.u32 %v161, 127
    %163 = vset.pattern.permute.xlu0 0
    %164 = vperm.xlu0 %163, %v155
    %v165 = vpop.permute.xlu0 %164
    %166 = vset.pattern.permute.xlu0 0
    %167 = vperm.xlu0 %166, %v157
    %v168 = vpop.permute.xlu0 %167
    %vm169 = vcmp.lt.s32.totalorder %v162, %v165
    %vm170 = vcmp.lt.s32.totalorder %v162, %v168
    %v171 = vsel %vm169, 1, 0
    %v172 = vsel %vm170, 1, 0
    %v173 = vcvt.s32.f32 %v171
    %v174 = vcvt.s32.f32 %v172
    %v175 = vlaneseq
    %v176 = vshrl.u32 %v175, 7
    %v177 = vsub.s32 0, %v176
    %v178 = vrot.slane %v173, %v177
    %180 = vbcast.lane.b32.xlu0 %v178, 256
    %v181 = vpop.permute.xlu0 %180
    %s183 = sor.u32 256, 8
    %184 = vbcast.lane.b32.xlu0 %v178, %s183
    %v185 = vpop.permute.xlu0 %184
    %v186 = vlaneseq
    %v187 = vshrl.u32 %v186, 7
    %v188 = vsub.s32 1, %v187
    %v189 = vrot.slane %v173, %v188
    %191 = vbcast.lane.b32.xlu0 %v189, 256
    %v192 = vpop.permute.xlu0 %191
    %s194 = sor.u32 256, 8
    %195 = vbcast.lane.b32.xlu0 %v189, %s194
    %v196 = vpop.permute.xlu0 %195
    %v197 = vlaneseq
    %v198 = vshrl.u32 %v197, 7
    %v199 = vsub.s32 2, %v198
    %v200 = vrot.slane %v173, %v199
    %202 = vbcast.lane.b32.xlu0 %v200, 256
    %v203 = vpop.permute.xlu0 %202
    %s205 = sor.u32 256, 8
    %206 = vbcast.lane.b32.xlu0 %v200, %s205
    %v207 = vpop.permute.xlu0 %206
    %v208 = vlaneseq
    %v209 = vshrl.u32 %v208, 7
    %v210 = vsub.s32 3, %v209
    %v211 = vrot.slane %v173, %v210
    %213 = vbcast.lane.b32.xlu0 %v211, 256
    %v214 = vpop.permute.xlu0 %213
    %s216 = sor.u32 256, 8
    %217 = vbcast.lane.b32.xlu0 %v211, %s216
    %v218 = vpop.permute.xlu0 %217
    %v219 = vlaneseq
    %v220 = vshrl.u32 %v219, 7
    %v221 = vsub.s32 4, %v220
    %v222 = vrot.slane %v173, %v221
    %224 = vbcast.lane.b32.xlu0 %v222, 256
    %v225 = vpop.permute.xlu0 %224
    %s227 = sor.u32 256, 8
    %228 = vbcast.lane.b32.xlu0 %v222, %s227
    %v229 = vpop.permute.xlu0 %228
    %v230 = vlaneseq
    %v231 = vshrl.u32 %v230, 7
    %v232 = vsub.s32 5, %v231
    %v233 = vrot.slane %v173, %v232
    %235 = vbcast.lane.b32.xlu0 %v233, 256
    %v236 = vpop.permute.xlu0 %235
    %s238 = sor.u32 256, 8
    %239 = vbcast.lane.b32.xlu0 %v233, %s238
    %v240 = vpop.permute.xlu0 %239
    %v241 = vlaneseq
    %v242 = vshrl.u32 %v241, 7
    %v243 = vsub.s32 6, %v242
    %v244 = vrot.slane %v173, %v243
    %246 = vbcast.lane.b32.xlu0 %v244, 256
    %v247 = vpop.permute.xlu0 %246
    %s249 = sor.u32 256, 8
    %250 = vbcast.lane.b32.xlu0 %v244, %s249
    %v251 = vpop.permute.xlu0 %250
    %v252 = vlaneseq
    %v253 = vshrl.u32 %v252, 7
    %v254 = vsub.s32 7, %v253
    %v255 = vrot.slane %v173, %v254
    %257 = vbcast.lane.b32.xlu0 %v255, 256
    %v258 = vpop.permute.xlu0 %257
    %s260 = sor.u32 256, 8
    %261 = vbcast.lane.b32.xlu0 %v255, %s260
    %v262 = vpop.permute.xlu0 %261
    %v263 = vlaneseq
    %v264 = vshrl.u32 %v263, 7
    %v265 = vsub.s32 0, %v264
    %v266 = vrot.slane %v174, %v265
    %268 = vbcast.lane.b32.xlu0 %v266, 256
    %v269 = vpop.permute.xlu0 %268
    %s271 = sor.u32 256, 8
    %272 = vbcast.lane.b32.xlu0 %v266, %s271
    %v273 = vpop.permute.xlu0 %272
    %v274 = vlaneseq
    %v275 = vshrl.u32 %v274, 7
    %v276 = vsub.s32 1, %v275
    %v277 = vrot.slane %v174, %v276
    %279 = vbcast.lane.b32.xlu0 %v277, 256
    %v280 = vpop.permute.xlu0 %279
    %s282 = sor.u32 256, 8
    %283 = vbcast.lane.b32.xlu0 %v277, %s282
    %v284 = vpop.permute.xlu0 %283
    %v285 = vlaneseq
    %v286 = vshrl.u32 %v285, 7
    %v287 = vsub.s32 2, %v286
    %v288 = vrot.slane %v174, %v287
    %290 = vbcast.lane.b32.xlu0 %v288, 256
    %v291 = vpop.permute.xlu0 %290
    %s293 = sor.u32 256, 8
    %294 = vbcast.lane.b32.xlu0 %v288, %s293
    %v295 = vpop.permute.xlu0 %294
    %v296 = vlaneseq
    %v297 = vshrl.u32 %v296, 7
    %v298 = vsub.s32 3, %v297
    %v299 = vrot.slane %v174, %v298
    %301 = vbcast.lane.b32.xlu0 %v299, 256
    %v302 = vpop.permute.xlu0 %301
    %s304 = sor.u32 256, 8
    %305 = vbcast.lane.b32.xlu0 %v299, %s304
    %v306 = vpop.permute.xlu0 %305
    %v307 = vlaneseq
    %v308 = vshrl.u32 %v307, 7
    %v309 = vsub.s32 4, %v308
    %v310 = vrot.slane %v174, %v309
    %312 = vbcast.lane.b32.xlu0 %v310, 256
    %v313 = vpop.permute.xlu0 %312
    %s315 = sor.u32 256, 8
    %316 = vbcast.lane.b32.xlu0 %v310, %s315
    %v317 = vpop.permute.xlu0 %316
    %v318 = vlaneseq
    %v319 = vshrl.u32 %v318, 7
    %v320 = vsub.s32 5, %v319
    %v321 = vrot.slane %v174, %v320
    %323 = vbcast.lane.b32.xlu0 %v321, 256
    %v324 = vpop.permute.xlu0 %323
    %s326 = sor.u32 256, 8
    %327 = vbcast.lane.b32.xlu0 %v321, %s326
    %v328 = vpop.permute.xlu0 %327
    %v329 = vlaneseq
    %v330 = vshrl.u32 %v329, 7
    %v331 = vsub.s32 6, %v330
    %v332 = vrot.slane %v174, %v331
    %334 = vbcast.lane.b32.xlu0 %v332, 256
    %v335 = vpop.permute.xlu0 %334
    %s337 = sor.u32 256, 8
    %338 = vbcast.lane.b32.xlu0 %v332, %s337
    %v339 = vpop.permute.xlu0 %338
    %v340 = vlaneseq
    %v341 = vshrl.u32 %v340, 7
    %v342 = vsub.s32 7, %v341
    %v343 = vrot.slane %v174, %v342
    %345 = vbcast.lane.b32.xlu0 %v343, 256
    %v346 = vpop.permute.xlu0 %345
    %s348 = sor.u32 256, 8
    %349 = vbcast.lane.b32.xlu0 %v343, %s348
    %v350 = vpop.permute.xlu0 %349
    %v351 = vmul.f32 %v123, %v181
    %v352 = vmul.f32 %v124, %v185
    %v353 = vmul.f32 %v125, %v192
    %v354 = vmul.f32 %v126, %v196
    %v355 = vmul.f32 %v127, %v203
    %v356 = vmul.f32 %v128, %v207
    %v357 = vmul.f32 %v129, %v214
    %v358 = vmul.f32 %v130, %v218
    %v359 = vmul.f32 %v131, %v225
    %v360 = vmul.f32 %v132, %v229
    %v361 = vmul.f32 %v133, %v236
    %v362 = vmul.f32 %v134, %v240
    %v363 = vmul.f32 %v135, %v247
    %v364 = vmul.f32 %v136, %v251
    %v365 = vmul.f32 %v137, %v258
    %v366 = vmul.f32 %v138, %v262
    %v367 = vmul.f32 %v139, %v269
    %v368 = vmul.f32 %v140, %v273
    %v369 = vmul.f32 %v141, %v280
    %v370 = vmul.f32 %v142, %v284
    %v371 = vmul.f32 %v143, %v291
    %v372 = vmul.f32 %v144, %v295
    %v373 = vmul.f32 %v145, %v302
    %v374 = vmul.f32 %v146, %v306
    %v375 = vmul.f32 %v147, %v313
    %v376 = vmul.f32 %v148, %v317
    %v377 = vmul.f32 %v149, %v324
    %v378 = vmul.f32 %v150, %v328
    %v379 = vmul.f32 %v151, %v335
    %v380 = vmul.f32 %v152, %v339
    %v381 = vmul.f32 %v153, %v346
    %v382 = vmul.f32 %v154, %v350
    %v383 = vsel %vm57, %v351, 0.0
    %v384 = vsel %vm57, %v352, 0.0
    %v385 = vadd.f32 %v383, %v384
    %v386 = vrot.slane %v385, 4
    %v387 = vadd.f32 %v385, %v386
    %v388 = vrot.slane %v387, 2
    %v389 = vadd.f32 %v387, %v388
    %v390 = vrot.slane %v389, 1
    %v391 = vadd.f32 %v389, %v390
    %v392 = vsel %vm57, %v353, 0.0
    %v393 = vsel %vm57, %v354, 0.0
    %v394 = vadd.f32 %v392, %v393
    %v395 = vrot.slane %v394, 4
    %v396 = vadd.f32 %v394, %v395
    %v397 = vrot.slane %v396, 2
    %v398 = vadd.f32 %v396, %v397
    %v399 = vrot.slane %v398, 1
    %v400 = vadd.f32 %v398, %v399
    %v401 = vsel %vm57, %v355, 0.0
    %v402 = vsel %vm57, %v356, 0.0
    %v403 = vadd.f32 %v401, %v402
    %v404 = vrot.slane %v403, 4
    %v405 = vadd.f32 %v403, %v404
    %v406 = vrot.slane %v405, 2
    %v407 = vadd.f32 %v405, %v406
    %v408 = vrot.slane %v407, 1
    %v409 = vadd.f32 %v407, %v408
    %v410 = vsel %vm57, %v357, 0.0
    %v411 = vsel %vm57, %v358, 0.0
    %v412 = vadd.f32 %v410, %v411
    %v413 = vrot.slane %v412, 4
    %v414 = vadd.f32 %v412, %v413
    %v415 = vrot.slane %v414, 2
    %v416 = vadd.f32 %v414, %v415
    %v417 = vrot.slane %v416, 1
    %v418 = vadd.f32 %v416, %v417
    %v419 = vsel %vm57, %v359, 0.0
    %v420 = vsel %vm57, %v360, 0.0
    %v421 = vadd.f32 %v419, %v420
    %v422 = vrot.slane %v421, 4
    %v423 = vadd.f32 %v421, %v422
    %v424 = vrot.slane %v423, 2
    %v425 = vadd.f32 %v423, %v424
    %v426 = vrot.slane %v425, 1
    %v427 = vadd.f32 %v425, %v426
    %v428 = vsel %vm57, %v361, 0.0
    %v429 = vsel %vm57, %v362, 0.0
    %v430 = vadd.f32 %v428, %v429
    %v431 = vrot.slane %v430, 4
    %v432 = vadd.f32 %v430, %v431
    %v433 = vrot.slane %v432, 2
    %v434 = vadd.f32 %v432, %v433
    %v435 = vrot.slane %v434, 1
    %v436 = vadd.f32 %v434, %v435
    %v437 = vsel %vm57, %v363, 0.0
    %v438 = vsel %vm57, %v364, 0.0
    %v439 = vadd.f32 %v437, %v438
    %v440 = vrot.slane %v439, 4
    %v441 = vadd.f32 %v439, %v440
    %v442 = vrot.slane %v441, 2
    %v443 = vadd.f32 %v441, %v442
    %v444 = vrot.slane %v443, 1
    %v445 = vadd.f32 %v443, %v444
    %v446 = vsel %vm57, %v365, 0.0
    %v447 = vsel %vm57, %v366, 0.0
    %v448 = vadd.f32 %v446, %v447
    %v449 = vrot.slane %v448, 4
    %v450 = vadd.f32 %v448, %v449
    %v451 = vrot.slane %v450, 2
    %v452 = vadd.f32 %v450, %v451
    %v453 = vrot.slane %v452, 1
    %v454 = vadd.f32 %v452, %v453
    %v455 = vsel %vm57, %v367, 0.0
    %v456 = vsel %vm57, %v368, 0.0
    %v457 = vadd.f32 %v455, %v456
    %v458 = vrot.slane %v457, 4
    %v459 = vadd.f32 %v457, %v458
    %v460 = vrot.slane %v459, 2
    %v461 = vadd.f32 %v459, %v460
    %v462 = vrot.slane %v461, 1
    %v463 = vadd.f32 %v461, %v462
    %v464 = vsel %vm57, %v369, 0.0
    %v465 = vsel %vm57, %v370, 0.0
    %v466 = vadd.f32 %v464, %v465
    %v467 = vrot.slane %v466, 4
    %v468 = vadd.f32 %v466, %v467
    %v469 = vrot.slane %v468, 2
    %v470 = vadd.f32 %v468, %v469
    %v471 = vrot.slane %v470, 1
    %v472 = vadd.f32 %v470, %v471
    %v473 = vsel %vm57, %v371, 0.0
    %v474 = vsel %vm57, %v372, 0.0
    %v475 = vadd.f32 %v473, %v474
    %v476 = vrot.slane %v475, 4
    %v477 = vadd.f32 %v475, %v476
    %v478 = vrot.slane %v477, 2
    %v479 = vadd.f32 %v477, %v478
    %v480 = vrot.slane %v479, 1
    %v481 = vadd.f32 %v479, %v480
    %v482 = vsel %vm57, %v373, 0.0
    %v483 = vsel %vm57, %v374, 0.0
    %v484 = vadd.f32 %v482, %v483
    %v485 = vrot.slane %v484, 4
    %v486 = vadd.f32 %v484, %v485
    %v487 = vrot.slane %v486, 2
    %v488 = vadd.f32 %v486, %v487
    %v489 = vrot.slane %v488, 1
    %v490 = vadd.f32 %v488, %v489
    %v491 = vsel %vm57, %v375, 0.0
    %v492 = vsel %vm57, %v376, 0.0
    %v493 = vadd.f32 %v491, %v492
    %v494 = vrot.slane %v493, 4
    %v495 = vadd.f32 %v493, %v494
    %v496 = vrot.slane %v495, 2
    %v497 = vadd.f32 %v495, %v496
    %v498 = vrot.slane %v497, 1
    %v499 = vadd.f32 %v497, %v498
    %v500 = vsel %vm57, %v377, 0.0
    %v501 = vsel %vm57, %v378, 0.0
    %v502 = vadd.f32 %v500, %v501
    %v503 = vrot.slane %v502, 4
    %v504 = vadd.f32 %v502, %v503
    %v505 = vrot.slane %v504, 2
    %v506 = vadd.f32 %v504, %v505
    %v507 = vrot.slane %v506, 1
    %v508 = vadd.f32 %v506, %v507
    %v509 = vsel %vm57, %v379, 0.0
    %v510 = vsel %vm57, %v380, 0.0
    %v511 = vadd.f32 %v509, %v510
    %v512 = vrot.slane %v511, 4
    %v513 = vadd.f32 %v511, %v512
    %v514 = vrot.slane %v513, 2
    %v515 = vadd.f32 %v513, %v514
    %v516 = vrot.slane %v515, 1
    %v517 = vadd.f32 %v515, %v516
    %v518 = vsel %vm57, %v381, 0.0
    %v519 = vsel %vm57, %v382, 0.0
    %v520 = vadd.f32 %v518, %v519
    %v521 = vrot.slane %v520, 4
    %v522 = vadd.f32 %v520, %v521
    %v523 = vrot.slane %v522, 2
    %v524 = vadd.f32 %v522, %v523
    %v525 = vrot.slane %v524, 1
    %v526 = vadd.f32 %v524, %v525
    %vm527 = vcmask 130048
    %v528 = vsel %vm527, %v173, 0.0
    %529 = vadd.xlane.f32.xlu0 %v528
    %v530 = vpop.xlane.xlu0 %529
    %v531 = vsel %vm527, %v174, 0.0
    %532 = vadd.xlane.f32.xlu0 %v531
    %v533 = vpop.xlane.xlu0 %532
    %v534 = vmax.f32 %v530, 1.0
    %v535 = vmax.f32 %v533, 1.0
    %v538 = vrot.slane %v534, 1
    %v539 = vrot.slane %v534, 2
    %v540 = vrot.slane %v534, 3
    %v541 = vrot.slane %v534, 4
    %v542 = vrot.slane %v534, 5
    %v543 = vrot.slane %v534, 6
    %v544 = vrot.slane %v534, 7
    %v545 = vrot.slane %v535, 1
    %v546 = vrot.slane %v535, 2
    %v547 = vrot.slane %v535, 3
    %v548 = vrot.slane %v535, 4
    %v549 = vrot.slane %v535, 5
    %v550 = vrot.slane %v535, 6
    %v551 = vrot.slane %v535, 7
    %v568 = vrcp.pop %v534
    %v569 = vmul.f32 %v391, %v568
    %v570 = vrcp.pop %v538
    %v571 = vmul.f32 %v400, %v570
    %v572 = vrcp.pop %v539
    %v573 = vmul.f32 %v409, %v572
    %v574 = vrcp.pop %v540
    %v575 = vmul.f32 %v418, %v574
    %v576 = vrcp.pop %v541
    %v577 = vmul.f32 %v427, %v576
    %v578 = vrcp.pop %v542
    %v579 = vmul.f32 %v436, %v578
    %v580 = vrcp.pop %v543
    %v581 = vmul.f32 %v445, %v580
    %v582 = vrcp.pop %v544
    %v583 = vmul.f32 %v454, %v582
    %v584 = vrcp.pop %v535
    %v585 = vmul.f32 %v463, %v584
    %v586 = vrcp.pop %v545
    %v587 = vmul.f32 %v472, %v586
    %v588 = vrcp.pop %v546
    %v589 = vmul.f32 %v481, %v588
    %v590 = vrcp.pop %v547
    %v591 = vmul.f32 %v490, %v590
    %v592 = vrcp.pop %v548
    %v593 = vmul.f32 %v499, %v592
    %v594 = vrcp.pop %v549
    %v595 = vmul.f32 %v508, %v594
    %v596 = vrcp.pop %v550
    %v597 = vmul.f32 %v517, %v596
    %v598 = vrcp.pop %v551
    %v599 = vmul.f32 %v526, %v598
    %vm608 = vcmask 1041409
    %v609 = vsel %vm608, %v116, %v115
    %vm610 = vcmask 1042434
    %v611 = vsel %vm610, %v117, %v609
    %vm612 = vcmask 1043459
    %v613 = vsel %vm612, %v118, %v611
    %vm614 = vcmask 1044484
    %v615 = vsel %vm614, %v119, %v613
    %vm616 = vcmask 1045509
    %v617 = vsel %vm616, %v120, %v615
    %vm618 = vcmask 1046534
    %v619 = vsel %vm618, %v121, %v617
    %vm620 = vcmask 1047559
    %v621 = vsel %vm620, %v122, %v619
    %v639 = vrot.slane %v571, 7
    %v640 = vsel %vm608, %v639, %v569
    %v641 = vrot.slane %v573, 6
    %v642 = vsel %vm610, %v641, %v640
    %v643 = vrot.slane %v575, 5
    %v644 = vsel %vm612, %v643, %v642
    %v645 = vrot.slane %v577, 4
    %v646 = vsel %vm614, %v645, %v644
    %v647 = vrot.slane %v579, 3
    %v648 = vsel %vm616, %v647, %v646
    %v649 = vrot.slane %v581, 2
    %v650 = vsel %vm618, %v649, %v648
    %v651 = vrot.slane %v583, 1
    %v652 = vsel %vm620, %v651, %v650
    %v653 = vrot.slane %v587, 7
    %v654 = vsel %vm608, %v653, %v585
    %v655 = vrot.slane %v589, 6
    %v656 = vsel %vm610, %v655, %v654
    %v657 = vrot.slane %v591, 5
    %v658 = vsel %vm612, %v657, %v656
    %v659 = vrot.slane %v593, 4
    %v660 = vsel %vm614, %v659, %v658
    %v661 = vrot.slane %v595, 3
    %v662 = vsel %vm616, %v661, %v660
    %v663 = vrot.slane %v597, 2
    %v664 = vsel %vm618, %v663, %v662
    %v665 = vrot.slane %v599, 1
    %v666 = vsel %vm620, %v665, %v664
    %v669 = vmul.f32 %v621, %v652
    %v670 = vmul.f32 %v621, %v666
    %671 = vrot.lane.b32.xlu0 %v652, 32
    %v672 = vpop.permute.xlu0 %671
    %673 = vrot.lane.b32.xlu0 %v666, 32
    %v674 = vpop.permute.xlu0 %673
    %679 = vrot.lane.b32.xlu0 %v669, 64
    %v680 = vpop.permute.xlu0 %679
    %681 = vrot.lane.b32.xlu0 %v670, 64
    %v682 = vpop.permute.xlu0 %681
    %v685 = vsel %vm57, %v621, %v672
    %v686 = vsel %vm57, %v621, %v674
    %vm687 = vcmask 523264
    %v688 = vsel %vm687, %v685, %v680
    %v689 = vsel %vm687, %v686, %v682
    %v690 = vld [vmem:[%s4] sm:$0xff]
    %v691 = vld [vmem:[%s4 + $0x8] sm:$0xff]
    %v692 = vld [vmem:[%s4 + $0x10] sm:$0xff]
    %v693 = vld [vmem:[%s4 + $0x18] sm:$0xff]
    %v694 = vld [vmem:[%s4 + $0x20] sm:$0xff]
    %v695 = vld [vmem:[%s4 + $0x28] sm:$0xff]
    %v696 = vld [vmem:[%s4 + $0x30] sm:$0xff]
    %v697 = vld [vmem:[%s4 + $0x38] sm:$0xff]
    %v698 = vld [vmem:[%s4 + $0x40] sm:$0xff]
    %v699 = vld [vmem:[%s4 + $0x48] sm:$0xff]
    %v700 = vld [vmem:[%s4 + $0x50] sm:$0xff]
    %v701 = vld [vmem:[%s4 + $0x58] sm:$0xff]
    %v702 = vld [vmem:[%s5] sm:$0x1]
    %704 = vset.pattern.permute.xlu0 0
    %705 = vperm.xlu0 %704, %v158
    %v706 = vpop.permute.xlu0 %705
    %709 = vset.pattern.permute.xlu0 0
    %710 = vperm.xlu0 %709, %v160
    %v711 = vpop.permute.xlu0 %710
    %v714 = vlaneseq
    %v715 = vshrl.u32 %v714, 7
    %v716 = vsub.s32 0, %v715
    %v717 = vrot.slane %v702, %v716
    %v719 = vmul.f32 %v706, %v717
    %v720 = vmul.f32 %v711, %v717
    %vm721 = vcmask 785408
    %v723 = vsel %vm721, %v688, 0
    %v726 = vsel %vm721, %v689, 0
    %728 = vmatprep.subr.mxu0 0.0
    %729 = vmatpush1.msra.mxu0 0.0
    %730 = vmatprep.subr.mxu0 0.0
    %731 = vmatpush1.msra.mxu0 0.0
    %732 = vmatprep.subr.mxu0 0.0
    %733 = vmatpush1.msra.mxu0 0.0
    %734 = vmatprep.subr.mxu0 0.0
    %735 = vmatpush1.msra.mxu0 0.0
    %736 = vmatprep.subr.mxu0 0.0
    %737 = vmatpush1.msra.mxu0 %v701
    %738 = vmatprep.subr.mxu0 0.0
    %739 = vmatpush1.msra.mxu0 %v700
    %740 = vmatprep.subr.mxu0 0.0
    %741 = vmatpush1.msra.mxu0 %v699
    %742 = vmatprep.subr.mxu0 0.0
    %743 = vmatpush1.msra.mxu0 %v698
    %744 = vmatprep.subr.mxu0 0.0
    %745 = vmatpush1.msra.mxu0 %v697
    %746 = vmatprep.subr.mxu0 0.0
    %747 = vmatpush1.msra.mxu0 %v696
    %748 = vmatprep.subr.mxu0 0.0
    %749 = vmatpush1.msra.mxu0 %v695
    %750 = vmatprep.subr.mxu0 0.0
    %751 = vmatpush1.msra.mxu0 %v694
    %752 = vmatprep.subr.mxu0 0.0
    %753 = vmatpush1.msra.mxu0 %v693
    %754 = vmatprep.subr.mxu0 0.0
    %755 = vmatpush1.msra.mxu0 %v692
    %756 = vmatprep.subr.mxu0 0.0
    %757 = vmatpush1.msra.mxu0 %v691
    %758 = vmatprep.subr.mxu0 0.0
    %759 = vmatpush1.msra.mxu0 %v690
    %760 = vmatprep.subr.mxu0 0.0
    %761 = vmatpush2.msra.mxu0 0.0
    %762 = vmatprep.subr.mxu0 0.0
    %763 = vmatpush2.msra.mxu0 0.0
    %764 = vmatprep.subr.mxu0 0.0
    %765 = vmatpush2.msra.mxu0 0.0
    %766 = vmatprep.subr.mxu0 0.0
    %767 = vmatpush2.msra.mxu0 0.0
    %768 = vmatprep.subr.mxu0 0.0
    %769 = vmatpush2.msra.mxu0 0.0
    %770 = vmatprep.subr.mxu0 0.0
    %771 = vmatpush2.msra.mxu0 0.0
    %772 = vmatprep.subr.mxu0 0.0
    %773 = vmatpush2.msra.mxu0 0.0
    %774 = vmatprep.subr.mxu0 0.0
    %775 = vmatpush2.msra.mxu0 0.0
    %776 = vmatprep.subr.mxu0 0.0
    %777 = vmatpush2.msra.mxu0 0.0
    %778 = vmatprep.subr.mxu0 0.0
    %779 = vmatpush2.msra.mxu0 0.0
    %780 = vmatprep.subr.mxu0 0.0
    %781 = vmatpush2.msra.mxu0 0.0
    %782 = vmatprep.subr.mxu0 0.0
    %783 = vmatpush2.msra.mxu0 0.0
    %784 = vmatprep.subr.mxu0 0.0
    %785 = vmatpush2.msra.mxu0 0.0
    %786 = vmatprep.subr.mxu0 0.0
    %787 = vmatpush2.msra.mxu0 0.0
    %788 = vmatprep.subr.mxu0 0.0
    %789 = vmatpush2.msra.mxu0 0.0
    %790 = vmatprep.subr.mxu0 0.0
    %791 = vmatpush2.msra.mxu0 0.0
    %792 = vmatprep.mubr.f32.mxu0 0.0
    %793 = vmatmul.mubr.f32.gmra.mxu0 %v723
    %v794 = vpop.f32.mrf.mxu0
    %v795 = vadd.f32 %v719, %v794
    %v796 = vpop.f32.mrf.mxu0
    %797 = vmatprep.mubr.f32.mxu0 0.0
    %798 = vmatmul.mubr.f32.gmra.mxu0 %v726
    %v799 = vpop.f32.mrf.mxu0
    %v800 = vadd.f32 %v720, %v799
    %v801 = vpop.f32.mrf.mxu0
    %802 = vdwg.mxu0
    %v803 = vld [vmem:[%s6] sm:$0x1]
    %v805 = vlaneseq
    %v806 = vshrl.u32 %v805, 7
    %v807 = vsub.s32 0, %v806
    %v808 = vrot.slane %v803, %v807
    %v810 = vadd.f32 %v795, %v808
    %v811 = vadd.f32 %v800, %v808
    %v812 = vmax.f32 %v810, 0.0
    %v813 = vmax.f32 %v811, 0.0
    %v814 = vld [vmem:[%s7] sm:$0x1]
    %v816 = vlaneseq
    %v817 = vshrl.u32 %v816, 7
    %v818 = vsub.s32 0, %v817
    %v819 = vrot.slane %v814, %v818
    %v821 = vmul.f32 %v812, %v819
    %v822 = vmul.f32 %v813, %v819
    %v823 = vsel %vm57, %v821, 0.0
    %824 = vadd.xlane.f32.xlu0 %v823
    %v825 = vpop.xlane.xlu0 %824
    %v826 = vsel %vm57, %v822, 0.0
    %827 = vadd.xlane.f32.xlu0 %v826
    %v828 = vpop.xlane.xlu0 %827
    %v829 = vld [vmem:[#allocation2] sm:$0x1]
    %v831 = vlaneseq
    %v832 = vshrl.u32 %v831, 7
    %v833 = vsub.s32 0, %v832
    %v834 = vrot.slane %v829, %v833
    %v836 = vadd.f32 %v825, %v834
    %v837 = vadd.f32 %v828, %v834
    %v838 = vsub.f32 %v836, %v837
    %840 = vset.pattern.permute.xlu0 0
    %841 = vperm.xlu0 %840, %v838
    %v842 = vpop.permute.xlu0 %841
    %844 = vst [vmem:[#allocation6] sm:$0xff] %v842
    // Predicated region
    $region42: #{tpu_custom_call.1} parent=1 // pred_check
      _
    $region43: #{tpu_custom_call.1} parent=1 // pred_check_branch
      %846 = sbr.rel (0) target = $region45
    $region44: #{tpu_custom_call.1} parent=1 // pred_region
      %s848 = ssub.s32 128, 128
      %849 = vsyncadd [#allocation5], %s848
      %s851 = sshll.u32 [#allocation6], 4
      %s852 = int_to_ptr.vmem [resolvable:$true] %s851
      %854 = dma.vmem_to_hbm [thread:$0]  %s852, 128, %s9, [#allocation5]
    $region45: #{tpu_custom_call.1} parent=1 // pred_fallthru
      _
    // Predicated region
    $region46: #{tpu_custom_call.1} parent=1 // pred_check
      _
    $region47: #{tpu_custom_call.1} parent=1 // pred_check_branch
      %856 = sbr.rel (0) target = $region49
    $region48: #{tpu_custom_call.1} parent=1 // pred_region
      %857 = dma.done [#allocation5], 128
    $region49: #{tpu_custom_call.1} parent=1 // pred_fallthru
      _
    %858 = vsyncpa [#allocation4], 1
    %859 = vsyncpa [#allocation5], 1

</llo_original>
